<compile_context>
chip_gen: v6e
topology: v6e:2x2x1
jax: 0.10.0
libtpu: 0.0.40
codegen_flags: <defaults>
</compile_context>

<pallas_src>
import math

import jax
import jax.numpy as jnp
from jax.experimental import pallas as pl
from jax.experimental.pallas import tpu as pltpu


def _sin_kernel(freq_ref, x_ref, o_ref):
    # freq_ref: (1, L) block, resident across all grid steps.
    # x_ref / o_ref: (tile_rows, L) blocks.
    x = x_ref[...].astype(jnp.float32)      # no-op when input is already f32
    f = freq_ref[...].astype(jnp.float32)
    o_ref[...] = jnp.sin(f * x).astype(o_ref.dtype)


def _choose_slab(n_total, dim, *, lane_cap=2048, min_rows=16):
    """Pick a lane-dense slab (rows, L) covering n_total elements.

    L is a multiple of dim (so freq tiles exactly) and of 128 (lane-dense,
    unmasked stores).  Returns (L, rows, pad) where pad = rows*L - n_total is
    the one-time zero-padding of the flattened input (0 when it divides).
    """
    base = math.lcm(dim, 128)
    max_mult = max(1, lane_cap // base)

    # Preferred: an L that divides n_total exactly (no padding) while keeping
    # rows >= min_rows so sublane tiles are fully utilised.
    if n_total % base == 0:
        for k in range(max_mult, 0, -1):
            L = base * k
            if n_total % L == 0 and n_total // L >= min_rows:
                return L, n_total // L, 0

    # Otherwise pad the flattened input (one small op) to a lane-dense slab,
    # shrinking L if needed so rows does not collapse below min_rows.
    k = max_mult
    while k > 1 and pl.cdiv(n_total, base * k) < min_rows:
        k -= 1
    L = base * k
    rows = pl.cdiv(n_total, L)
    return L, rows, rows * L - n_total


def sin_module(x, freq, *, tile_budget_bytes=4 * 1024 * 1024,
               small_input_threshold=256 * 1024):
    """Apply Sin module: sin(freq * x).

    x:    (..., dim) array
    freq: (1, dim) parameter
    """
    dim = x.shape[-1]
    assert freq.shape == (1, dim)

    orig_shape = x.shape
    n_total = x.size

    # Fast path: tiny calls are 100% pallas_call overhead; let XLA fuse them.
    if n_total < small_input_threshold:
        return jnp.sin(freq * x)

    itemsize = jnp.dtype(x.dtype).itemsize
    sublane = max(8, 32 // itemsize)          # 8 f32, 16 bf16, 32 int8/fp8

    L, rows, pad = _choose_slab(n_total, dim, min_rows=2 * sublane)

    x_flat = x.reshape(-1)
    if pad:
        x_flat = jnp.pad(x_flat, (0, pad))    # sin(freq*0)=0, sliced off below
    x2d = x_flat.reshape(rows, L)
    freq_row = jnp.tile(freq, (1, L // dim)) if L != dim else freq  # tiny one-time op

    # Row tile from a VMEM budget, rounded to the dtype's sublane multiple.
    bytes_per_row = L * itemsize
    tr = max(1, tile_budget_bytes // bytes_per_row)
    # Guarantee >= 2 grid steps when rows allow it, so v7x's two TensorCores
    # both get work (harmless on single-TC v5e/v6e).
    if rows >= 2 * sublane:
        tr = min(tr, pl.cdiv(rows, 2))
    if tr >= rows:
        tile_rows = rows
    else:
        tile_rows = max(sublane, (tr // sublane) * sublane)
        tile_rows = min(tile_rows, rows)

    grid = (pl.cdiv(rows, tile_rows),)        # ragged last block handled by Pallas

    out = pl.pallas_call(
        _sin_kernel,
        out_shape=jax.ShapeDtypeStruct((rows, L), x.dtype),
        grid_spec=pltpu.PrefetchScalarGridSpec(
            num_scalar_prefetch=0,
            grid=grid,
            in_specs=[
                # freq: same (1, L) block for every grid step (stays resident)
                pl.BlockSpec((1, L), lambda i: (0, 0)),
                # x: row-tile i
                pl.BlockSpec((tile_rows, L), lambda i: (i, 0)),
            ],
            out_specs=pl.BlockSpec((tile_rows, L), lambda i: (i, 0)),
        ),
        compiler_params=pltpu.CompilerParams(
            dimension_semantics=("parallel",),
            vmem_limit_bytes=32 * 1024 * 1024,
        ),
    )(freq_row, x2d)

    out_flat = out.reshape(-1)
    if pad:
        out_flat = out_flat[:n_total]
    return out_flat.reshape(orig_shape)


if __name__ == "__main__":
    key = jax.random.PRNGKey(0)
    w = 10.0  # matches Sin(dim, w=10)

    # Small shapes consistent with Hyena usage: (batch, seq, dim)
    batch, seq, dim = 2, 8, 32
    x = jax.random.normal(key, (batch, seq, dim), dtype=jnp.float32)
    # Deterministic parameter init, same as nn.Parameter(w * torch.ones(1, dim))
    freq = w * jnp.ones((1, dim), dtype=jnp.float32)

    # Default dispatch: tiny input -> fused XLA fast path.
    y_fast = sin_module(x, freq)
    # Force the Pallas kernel path (the path larger Hyena activations take).
    y_pallas = sin_module(x, freq, small_input_threshold=0)

    # Second small case exercising the padded lane-dense path + multi-step grid.
    k2 = jax.random.PRNGKey(1)
    x2 = jax.random.normal(k2, (3, 33, dim), dtype=jnp.float32)
    y2 = sin_module(x2, freq, small_input_threshold=0)

    jax.block_until_ready((y_fast, y_pallas, y2))

    # Correctness vs plain-JAX reference of torch.sin(freq * x)
    y_ref = jnp.sin(freq * x)
    y2_ref = jnp.sin(freq * x2)
    assert y_fast.shape == x.shape and y_pallas.shape == x.shape
    assert y2.shape == x2.shape
    assert jnp.allclose(y_fast, y_ref, atol=1e-5, rtol=1e-5)
    assert jnp.allclose(y_pallas, y_ref, atol=1e-5, rtol=1e-5)
    assert jnp.allclose(y2, y2_ref, atol=1e-5, rtol=1e-5)

    print("KERNEL_OK")
</pallas_src>

<mosaic_0001>
module attributes {stable_mosaic.version = 11 : i64} {
  func.func @_sin_kernel(%arg0: i32, %arg1: memref<1x128xf32, #tpu.memory_space<vmem>>, %arg2: memref<4x128xf32, #tpu.memory_space<vmem>>, %arg3: memref<4x128xf32, #tpu.memory_space<vmem>>) attributes {dimension_semantics = [#tpu.dimension_semantics<parallel>], iteration_bounds = array<i64: 1>, scalar_prefetch = 0 : i64, scratch_operands = 0 : i64, tpu.core_type = #tpu.core_type<tc>, window_params = [{pipeline_mode = #tpu.pipeline_mode<synchronous>, transform_indices = @transform_0, window_bounds = array<i64: 1, 128>}, {transform_indices = @transform_1, window_bounds = array<i64: 4, 128>}, {transform_indices = @transform_2, window_bounds = array<i64: 4, 128>}]} {
    %c0 = arith.constant 0 : index
    %c0_0 = arith.constant 0 : index
    %0 = vector.load %arg2[%c0, %c0_0] : memref<4x128xf32, #tpu.memory_space<vmem>>, vector<4x128xf32>
    %c0_1 = arith.constant 0 : index
    %c0_2 = arith.constant 0 : index
    %1 = vector.load %arg1[%c0_1, %c0_2] : memref<1x128xf32, #tpu.memory_space<vmem>>, vector<1x128xf32>
    %2 = vector.broadcast %1 : vector<1x128xf32> to vector<4x128xf32>
    %3 = arith.mulf %2, %0 : vector<4x128xf32>
    %4 = math.sin %3 : vector<4x128xf32>
    %c0_3 = arith.constant 0 : index
    %c0_4 = arith.constant 0 : index
    %5 = vector.load %arg3[%c0_3, %c0_4] : memref<4x128xf32, #tpu.memory_space<vmem>>, vector<4x128xf32>
    tpu.vector_store %arg3[%c0_3, %c0_4], %4 {strides = array<i32>} : memref<4x128xf32, #tpu.memory_space<vmem>>, vector<4x128xf32>,
    return
  }
  func.func @transform_0(%arg0: i32) -> (i32, i32) {
    %c0_i32 = arith.constant 0 : i32
    %c0_i32_0 = arith.constant 0 : i32
    %c0_i32_1 = arith.constant 0 : i32
    return %c0_i32, %c0_i32_0 : i32, i32
  }
  func.func @transform_1(%arg0: i32) -> (i32, i32) {
    %c0_i32 = arith.constant 0 : i32
    %c0_i32_0 = arith.constant 0 : i32
    return %arg0, %c0_i32 : i32, i32
  }
  func.func @transform_2(%arg0: i32) -> (i32, i32) {
    %c0_i32 = arith.constant 0 : i32
    %c0_i32_0 = arith.constant 0 : i32
    return %arg0, %c0_i32 : i32, i32
  }
}

</mosaic_0001>

<llo_original>
// kernel: tpu_custom_call.1
$region0: #{tpu_custom_call.1}
  #allocation0 [shape = 'u32[]', space=smem, size = 0x4, offset = 0x4, fixed_abs, tag = 'smem constant byte address 0x4 - core index']
  #allocation1 [shape = 'u32[144,128]{1,0:T(1,128)}', space=vmem, size = 0x12000, scoped, tag = 'internal scratch']
  %s0 = inlined_call_operand.hbm [shape: f32[1,128], index: 0, kind: input, shape index: {}]
  %s1 = inlined_call_operand.hbm [shape: f32[4,128], index: 1, kind: input, shape index: {}]
  %s2 = inlined_call_operand.hbm [shape: f32[4,128], index: 2, kind: output, shape index: {}]
  %s3 = sld [smem:[#allocation0]]
  $region26: #{tpu_custom_call.1} parent=0
    _
  %s5 = ssub.s32 1, %s3
  %s6 = scalar_select 0, %s5, %s3
  $region1: #{tpu_custom_call.1} parent=0
    #allocation2 [shape = 'u8[512]{0}', space=vmem, size = 0x400, scoped, tag = 'input window, operand 0, single buffered']
    #allocation3 [shape = 's32[1]{0}', space=sflag, size = 0x4, scoped, tag = 'scoped memory for tpu_custom_call.1']
    #allocation4 [shape = 's32[1]{0}', space=sflag, size = 0x4, scoped, tag = 'scoped memory for tpu_custom_call.1']
    #allocation5 [shape = 'u8[2048]{0}', space=vmem, size = 0x800, scoped, tag = 'input window, operand 1, single buffered']
    #allocation6 [shape = 's32[1]{0}', space=sflag, size = 0x4, scoped, tag = 'scoped memory for tpu_custom_call.1']
    #allocation7 [shape = 'u8[2048]{0}', space=vmem, size = 0x800, scoped, tag = 'output window, operand 0, single buffered']
    %7 = vsyncpa [#allocation3], 0
    %8 = vsyncpa [#allocation6], 0
    %9 = vsyncpa [#allocation4], 0
    // Predicated region
    $region2: #{tpu_custom_call.1} parent=1 // pred_check
      _
    $region3: #{tpu_custom_call.1} parent=1 // pred_check_branch
      %11 = sbr.rel (0) target = $region5
    $region4: #{tpu_custom_call.1} parent=1 // pred_region
      %s13 = ssub.s32 16, 16
      %14 = vsyncadd [#allocation3], %s13
      %s16 = sshll.u32 [#allocation2], 4
      %s17 = int_to_ptr.vmem [resolvable:$true] %s16
      %19 = dma.hbm_to_vmem [thread:$0]  %s0, 16, %s17, [#allocation3]
    $region5: #{tpu_custom_call.1} parent=1 // pred_fallthru
      _
    // Predicated region
    $region6: #{tpu_custom_call.1} parent=1 // pred_check
      _
    $region7: #{tpu_custom_call.1} parent=1 // pred_check_branch
      %21 = sbr.rel (0) target = $region9
    $region8: #{tpu_custom_call.1} parent=1 // pred_region
      %s23 = ssub.s32 64, 64
      %24 = vsyncadd [#allocation6], %s23
      %s26 = sshll.u32 [#allocation5], 4
      %s27 = int_to_ptr.vmem [resolvable:$true] %s26
      %29 = dma.hbm_to_vmem [thread:$0]  %s1, 64, %s27, [#allocation6]
    $region9: #{tpu_custom_call.1} parent=1 // pred_fallthru
      _
    // Predicated region
    $region10: #{tpu_custom_call.1} parent=1 // pred_check
      _
    $region11: #{tpu_custom_call.1} parent=1 // pred_check_branch
      %31 = sbr.rel (0) target = $region13
    $region12: #{tpu_custom_call.1} parent=1 // pred_region
      %32 = dma.done [#allocation3], 16
    $region13: #{tpu_custom_call.1} parent=1 // pred_fallthru
      _
    // Predicated region
    $region14: #{tpu_custom_call.1} parent=1 // pred_check
      _
    $region15: #{tpu_custom_call.1} parent=1 // pred_check_branch
      %34 = sbr.rel (0) target = $region17
    $region16: #{tpu_custom_call.1} parent=1 // pred_region
      %35 = dma.done [#allocation6], 64
    $region17: #{tpu_custom_call.1} parent=1 // pred_fallthru
      _
    %v36 = vld [vmem:[#allocation5] sm:$0xf]
    %v37 = vld [vmem:[#allocation2] sm:$0x1]
    %v39 = vlaneseq
    %v40 = vshrl.u32 %v39, 7
    %v41 = vsub.s32 0, %v40
    %v42 = vrot.slane %v37, %v41
    %v44 = vmul.f32 %v42, %v36
    %v45 = vand.u32 2147483647, %v44
    %vm46 = vcmp.le.f32.partialorder %v45, 0.7853982
    %vm47 = vcmp.lt.s32.totalorder %v44, 0
    %v48 = vand.u32 %v44, 2139095040
    %v49 = vshrl.u32 %v48, 23
    %v50 = vsub.s32 %v49, 127
    %v51 = vand.u32 2147483647, %v44
    %v52 = vand.u32 %v51, 8388607
    %v53 = vor.u32 %v52, 8388608
    %v54 = vsub.s32 0, %v53
    %v55 = vadd.s32 %v50, 1
    %vm56 = vcmp.gt.s32.totalorder %v55, 0
    %v57 = vsel %vm56, %v55, 0
    %v58 = vshrl.u32 %v57, 5
    %v59 = vand.u32 %v57, 31
    %v60 = vsub.s32 32, %v59
    %v61 = vshrl.u32 683565275, %v60
    %v62 = vshll.u32 683565275, %v59
    %v63 = vshrl.u32 2475754826, %v60
    %v64 = vor.u32 %v62, %v63
    %v65 = vshll.u32 2475754826, %v59
    %v66 = vshrl.u32 2131351028, %v60
    %v67 = vor.u32 %v65, %v66
    %v68 = vshll.u32 2131351028, %v59
    %v69 = vshrl.u32 2102212464, %v60
    %v70 = vor.u32 %v68, %v69
    %v71 = vshll.u32 2102212464, %v59
    %v72 = vshrl.u32 920167782, %v60
    %v73 = vor.u32 %v71, %v72
    %v74 = vshll.u32 920167782, %v59
    %v75 = vshrl.u32 1326507024, %v60
    %v76 = vor.u32 %v74, %v75
    %vm77 = vcmp.lt.s32.totalorder %v58, 1
    %vm78 = vcmp.lt.s32.totalorder %v58, 2
    %vm79 = vcmp.lt.s32.totalorder %v58, 3
    %vm80 = vcmp.lt.s32.totalorder %v58, 4
    %v81 = vsel %vm77, %v61, %v64
    %v82 = vsel %vm80, %v70, 2102212464
    %v83 = vsel %vm79, %v67, %v82
    %v84 = vsel %vm78, %v81, %v83
    %v85 = vsel %vm77, %v64, %v67
    %v86 = vsel %vm80, %v73, 920167782
    %v87 = vsel %vm79, %v70, %v86
    %v88 = vsel %vm78, %v85, %v87
    %v89 = vsel %vm77, %v67, %v70
    %v90 = vsel %vm80, %v76, 1326507024
    %v91 = vsel %vm79, %v73, %v90
    %v92 = vsel %vm78, %v89, %v91
    %v93 = vshll.u32 %v53, 8
    %v94 = vmul.u32.u64.compose %v93, %v92
    %v95 = vextract.low.u32 %v94
    %v96 = vextract.high.u32 %v94
    %v97 = vmul.u32.u64.compose %v93, %v88
    %v98 = vextract.low.u32 %v97
    %v99 = vextract.high.u32 %v97
    %v100 = vmul.u32 %v93, %v84
    %v101 = vadd.s32 %v96, %v98
    %vm102 = vc.u32 %v96, %v98
    %v103 = vadd.s32 %v99, 1
    %v104 = vsel %vm102, %v103, %v99
    %v105 = vadd.s32 %v100, %v104
    %v106 = vadd.s32 %v105, 536870912
    %v107 = vshrl.u32 %v106, 30
    %v108 = vshll.u32 %v107, 30
    %v109 = vsub.s32 %v105, %v108
    %vm110 = vcmp.lt.s32.totalorder %v109, 0
    %v111 = vsub.s32 0, %v109
    %v112 = vsel %vm110, %v111, %v109
    %v113 = vclz %v112
    %v114 = vsub.s32 %v113, 2
    %vm115 = vcmp.gt.s32.totalorder 0, %v114
    %v116 = vsel %vm115, 0, %v114
    %v117 = vsub.s32 32, %v116
    %v118 = vshll.u32 %v109, %v116
    %v119 = vshrl.u32 %v101, %v117
    %v120 = vor.u32 %v118, %v119
    %v121 = vsub.s32 4294967266, %v116
    %v122 = vadd.s32 %v121, 127
    %v123 = vshll.u32 %v122, 23
    %v124 = vor.u32 4788187, %v123
    %v125 = vand.u32 2147483647, %v124
    %v127 = vcvt.s32.f32 %v120
    %v128 = vmul.f32 %v127, %v125
    %v129 = vxor.u32 %v128, 2147483648
    %v130 = vsel %vm47, %v129, %v128
    %v131 = vsub.s32 4, %v107
    %v132 = vsel %vm47, %v131, %v107
    %v133 = vsel %vm46, %v44, %v130
    %v134 = vsel %vm46, 0, %v132
    %v135 = vcosq.f32.pop %v133
    %v136 = vsinq.f32.pop %v133
    %vm137 = vweird.f32 %v44
    %v138 = vadd.s32 %v134, 3
    %v139 = vand.u32 %v138, 3
    %vm140 = vcmp.lt.s32.totalorder %v139, 2
    %vm141 = vcmp.eq.s32.totalorder %v139, 0
    %v142 = vxor.u32 %v136, 2147483648
    %v143 = vsel %vm141, %v135, %v142
    %vm144 = vcmp.eq.s32.totalorder %v139, 2
    %v145 = vxor.u32 %v135, 2147483648
    %v146 = vsel %vm144, %v145, %v136
    %v147 = vsel %vm140, %v143, %v146
    %v148 = vsel %vm137, nan, %v147
    %149 = vst [vmem:[#allocation7] sm:$0xf] %v148
    // Predicated region
    $region18: #{tpu_custom_call.1} parent=1 // pred_check
      _
    $region19: #{tpu_custom_call.1} parent=1 // pred_check_branch
      %151 = sbr.rel (0) target = $region21
    $region20: #{tpu_custom_call.1} parent=1 // pred_region
      %s153 = ssub.s32 64, 64
      %154 = vsyncadd [#allocation4], %s153
      %s156 = sshll.u32 [#allocation7], 4
      %s157 = int_to_ptr.vmem [resolvable:$true] %s156
      %159 = dma.vmem_to_hbm [thread:$0]  %s157, 64, %s2, [#allocation4]
    $region21: #{tpu_custom_call.1} parent=1 // pred_fallthru
      _
    // Predicated region
    $region22: #{tpu_custom_call.1} parent=1 // pred_check
      _
    $region23: #{tpu_custom_call.1} parent=1 // pred_check_branch
      %161 = sbr.rel (0) target = $region25
    $region24: #{tpu_custom_call.1} parent=1 // pred_region
      %162 = dma.done [#allocation4], 64
    $region25: #{tpu_custom_call.1} parent=1 // pred_fallthru
      _
    %163 = vsyncpa [#allocation3], 1
    %164 = vsyncpa [#allocation6], 1
    %165 = vsyncpa [#allocation4], 1

</llo_original>
